<compile_context>
chip_gen: v7x
topology: tpu7x:2x2x1
jax: 0.10.0
libtpu: 0.0.40
codegen_flags: <defaults>
</compile_context>

<pallas_src>
import functools

import jax
import jax.numpy as jnp
from jax.experimental import pallas as pl
from jax.experimental.pallas import tpu as pltpu


# ----------------------------- generation-aware budgets -----------------------------

def _vmem_capacity():
    try:
        return int(pltpu.get_tpu_info().vmem_capacity_bytes)
    except Exception:
        return 64 * 1024 * 1024          # conservative (v7x-like) fallback


_VMEM_CAP = _vmem_capacity()
_BIG_VMEM = _VMEM_CAP >= 100 * 1024 * 1024          # v5e / v6e: 128 MiB physical VMEM
_VMEM_LIMIT = min((_VMEM_CAP * 3) // 4, 100 * 1024 * 1024)

if _BIG_VMEM:
    # v5e/v6e: weight-streaming bound on skinny-M linears -> large k/n tiles.
    _TM, _TN, _TK, _TI = 512, 512, 1024, 512
else:
    # v7x: 64 MiB VMEM per TC, 3.2 TB/s HBM -> smaller tiles, more grid steps.
    _TM, _TN, _TK, _TI = 256, 256, 512, 256


# ----------------------------- helpers -----------------------------

def _round_up(x, m):
    return ((x + m - 1) // m) * m


def _pick_tile(dim, pref, align):
    """Largest tile <= pref that is align-aligned and covers small dims."""
    return min(pref, _round_up(dim, align))


def _pad2(x, rows, cols):
    pr, pc = rows - x.shape[0], cols - x.shape[1]
    if pr == 0 and pc == 0:
        return x
    return jnp.pad(x, ((0, pr), (0, pc)))


def _bf16(x):
    return x.astype(jnp.bfloat16)


# ----------------------------- generic tiled linear -----------------------------

def _linear_kernel(x_ref, w_ref, b_ref, o_ref, *, activation):
    k = pl.program_id(2)

    @pl.when(k == 0)
    def _():
        o_ref[...] = jnp.zeros_like(o_ref)

    # bf16 operands, f32 accumulation directly into the resident output block.
    o_ref[...] += jnp.dot(_bf16(x_ref[...]), _bf16(w_ref[...]),
                          preferred_element_type=jnp.float32)

    @pl.when(k == pl.num_programs(2) - 1)
    def _():
        y = o_ref[...] + b_ref[...]
        if activation == "gelu":
            # TODO(synk): HF BERT uses exact erf-GELU; tanh approximation used
            # because tanh is guaranteed to lower on the TPU EUP.
            y = jax.nn.gelu(y, approximate=True)
        o_ref[...] = y


def linear(x, w, b, activation=None, tm_pref=None, tn_pref=None, tk_pref=None):
    tm_pref = _TM if tm_pref is None else tm_pref
    tn_pref = _TN if tn_pref is None else tn_pref
    tk_pref = _TK if tk_pref is None else tk_pref
    m, kdim = x.shape
    n = w.shape[1]
    tm = _pick_tile(m, tm_pref, 8)
    tn = _pick_tile(n, tn_pref, 128)
    tk = _pick_tile(kdim, tk_pref, 128)
    mp, np_, kp = _round_up(m, tm), _round_up(n, tn), _round_up(kdim, tk)
    xp = _pad2(x, mp, kp)
    wp = _pad2(w, kp, np_)
    bp = _pad2(b.reshape(1, -1), 1, np_)

    # TODO(synk): if profiling shows exposed weight DMA after the bf16 change,
    # add pipeline_mode=pl.Buffered(3) on the weight BlockSpec.
    out = pl.pallas_call(
        functools.partial(_linear_kernel, activation=activation),
        out_shape=jax.ShapeDtypeStruct((mp, np_), jnp.float32),
        grid=(mp // tm, np_ // tn, kp // tk),
        in_specs=[
            pl.BlockSpec((tm, tk), lambda i, j, k: (i, k)),
            pl.BlockSpec((tk, tn), lambda i, j, k: (k, j)),
            pl.BlockSpec((1, tn), lambda i, j, k: (0, j)),
        ],
        out_specs=pl.BlockSpec((tm, tn), lambda i, j, k: (i, j)),
        compiler_params=pltpu.CompilerParams(
            dimension_semantics=("parallel", "parallel", "arbitrary"),
            vmem_limit_bytes=_VMEM_LIMIT),
    )(xp, wp, bp)
    if (mp, np_) != (m, n):
        out = out[:m, :n]
    return out


# ----------------------------- linear (+residual) + LayerNorm -----------------------------

def linear_layernorm(x, w, b, gamma, beta, residual=None, eps=1e-12,
                     tm_pref=None, tk_pref=None):
    """out = LayerNorm(x @ w + b [+ residual]); LN over the full (unpadded) N=H axis."""
    tm_pref = _TM if tm_pref is None else tm_pref
    tk_pref = _TK if tk_pref is None else tk_pref
    m, kdim = x.shape
    h = w.shape[1]
    has_res = residual is not None
    tm = _pick_tile(m, tm_pref, 8)
    tk = _pick_tile(kdim, tk_pref, 128)
    mp, kp = _round_up(m, tm), _round_up(kdim, tk)

    xp = _pad2(x, mp, kp)
    wp = _pad2(w, kp, h)
    ops = [xp, wp, b.reshape(1, h), gamma.reshape(1, h), beta.reshape(1, h)]
    in_specs = [
        pl.BlockSpec((tm, tk), lambda i, k: (i, k)),
        pl.BlockSpec((tk, h), lambda i, k: (k, 0)),
        pl.BlockSpec((1, h), lambda i, k: (0, 0)),
        pl.BlockSpec((1, h), lambda i, k: (0, 0)),
        pl.BlockSpec((1, h), lambda i, k: (0, 0)),
    ]
    if has_res:
        ops.append(_pad2(residual, mp, h))
        in_specs.append(pl.BlockSpec((tm, h), lambda i, k: (i, 0)))

    def kernel(*refs):
        if has_res:
            x_ref, w_ref, b_ref, g_ref, bt_ref, r_ref, o_ref = refs
        else:
            x_ref, w_ref, b_ref, g_ref, bt_ref, o_ref = refs
        k = pl.program_id(1)

        @pl.when(k == 0)
        def _():
            o_ref[...] = jnp.zeros_like(o_ref)

        o_ref[...] += jnp.dot(_bf16(x_ref[...]), _bf16(w_ref[...]),
                              preferred_element_type=jnp.float32)

        @pl.when(k == pl.num_programs(1) - 1)
        def _():
            y = o_ref[...] + b_ref[...]
            if has_res:
                y = y + r_ref[...]
            mean = jnp.mean(y, axis=-1, keepdims=True)
            c = y - mean
            var = jnp.mean(c * c, axis=-1, keepdims=True)
            o_ref[...] = (c * jax.lax.rsqrt(var + eps)) * g_ref[...] + bt_ref[...]

    out = pl.pallas_call(
        kernel,
        out_shape=jax.ShapeDtypeStruct((mp, h), jnp.float32),
        grid=(mp // tm, kp // tk),
        in_specs=in_specs,
        out_specs=pl.BlockSpec((tm, h), lambda i, k: (i, 0)),
        compiler_params=pltpu.CompilerParams(
            dimension_semantics=("parallel", "arbitrary"),
            vmem_limit_bytes=_VMEM_LIMIT),
    )(*ops)
    if mp != m:
        out = out[:m]
    return out


# ----------------------------- standalone LayerNorm -----------------------------

def _ln_kernel(x_ref, g_ref, b_ref, o_ref, *, eps):
    x = x_ref[...]
    mean = jnp.mean(x, axis=-1, keepdims=True)
    c = x - mean
    var = jnp.mean(c * c, axis=-1, keepdims=True)
    o_ref[...] = (c * jax.lax.rsqrt(var + eps)) * g_ref[...] + b_ref[...]


def layernorm(x, gamma, beta, eps, tm_pref=512):
    m, h = x.shape
    tm = _pick_tile(m, tm_pref, 8)
    mp = _round_up(m, tm)
    xp = _pad2(x, mp, h)
    out = pl.pallas_call(
        functools.partial(_ln_kernel, eps=eps),
        out_shape=jax.ShapeDtypeStruct((mp, h), jnp.float32),
        grid=(mp // tm,),
        in_specs=[pl.BlockSpec((tm, h), lambda i: (i, 0)),
                  pl.BlockSpec((1, h), lambda i: (0, 0)),
                  pl.BlockSpec((1, h), lambda i: (0, 0))],
        out_specs=pl.BlockSpec((tm, h), lambda i: (i, 0)),
        compiler_params=pltpu.CompilerParams(
            dimension_semantics=("parallel",),
            vmem_limit_bytes=_VMEM_LIMIT),
    )(xp, gamma.reshape(1, h), beta.reshape(1, h))
    if mp != m:
        out = out[:m]
    return out


# ----------------------------- fused FFN (wi+GELU+wf+residual+LN) -----------------------------

def ffn(x, wi, bi, wf, bf, gamma, beta, residual, eps=1e-12,
        tm_pref=None, ti_pref=None):
    """LayerNorm(gelu(x@wi+bi) @ wf + bf + residual), pipelined over `inter`.

    The (rows, inter) intermediate lives only in VMEM, one `inter` tile at a
    time, and is carried as bf16 into the second MXU pass.
    """
    tm_pref = _TM if tm_pref is None else tm_pref
    ti_pref = _TI if ti_pref is None else ti_pref
    m, h = x.shape
    inter = wi.shape[1]
    tm = _pick_tile(m, tm_pref, 8)
    ti = _pick_tile(inter, ti_pref, 128)
    mp, ip = _round_up(m, tm), _round_up(inter, ti)

    xp = _pad2(x, mp, h)
    rp = _pad2(residual, mp, h)
    wip = _pad2(wi, h, ip)
    bip = _pad2(bi.reshape(1, -1), 1, ip)
    wfp = _pad2(wf, ip, h)

    def kernel(x_ref, wi_ref, bi_ref, wf_ref, bf_ref, g_ref, bt_ref, r_ref,
               o_ref):
        j = pl.program_id(1)

        @pl.when(j == 0)
        def _():
            o_ref[...] = jnp.zeros_like(o_ref)

        hblk = jnp.dot(_bf16(x_ref[...]), _bf16(wi_ref[...]),
                       preferred_element_type=jnp.float32) + bi_ref[...]
        # TODO(synk): HF BERT uses exact erf-GELU; tanh approximation used here.
        hblk = jax.nn.gelu(hblk, approximate=True)
        o_ref[...] += jnp.dot(_bf16(hblk), _bf16(wf_ref[...]),
                              preferred_element_type=jnp.float32)

        @pl.when(j == pl.num_programs(1) - 1)
        def _():
            y = o_ref[...] + bf_ref[...] + r_ref[...]
            mean = jnp.mean(y, axis=-1, keepdims=True)
            c = y - mean
            var = jnp.mean(c * c, axis=-1, keepdims=True)
            o_ref[...] = (c * jax.lax.rsqrt(var + eps)) * g_ref[...] + bt_ref[...]

    out = pl.pallas_call(
        kernel,
        out_shape=jax.ShapeDtypeStruct((mp, h), jnp.float32),
        grid=(mp // tm, ip // ti),
        in_specs=[
            pl.BlockSpec((tm, h), lambda i, j: (i, 0)),   # x (resident over j)
            pl.BlockSpec((h, ti), lambda i, j: (0, j)),   # wi tile
            pl.BlockSpec((1, ti), lambda i, j: (0, j)),   # bi tile
            pl.BlockSpec((ti, h), lambda i, j: (j, 0)),   # wf tile
            pl.BlockSpec((1, h), lambda i, j: (0, 0)),    # bf
            pl.BlockSpec((1, h), lambda i, j: (0, 0)),    # gamma
            pl.BlockSpec((1, h), lambda i, j: (0, 0)),    # beta
            pl.BlockSpec((tm, h), lambda i, j: (i, 0)),   # residual
        ],
        out_specs=pl.BlockSpec((tm, h), lambda i, j: (i, 0)),
        compiler_params=pltpu.CompilerParams(
            dimension_semantics=("parallel", "arbitrary"),
            vmem_limit_bytes=_VMEM_LIMIT),
    )(xp, wip, bip, wfp, bf.reshape(1, h), gamma.reshape(1, h),
      beta.reshape(1, h), rp)
    if mp != m:
        out = out[:m]
    return out


# ----------------------------- attention (grid over batch x heads) -----------------------------

def _attn_kernel(q_ref, k_ref, v_ref, m_ref, o_ref, *, scale):
    q = _bf16(q_ref[0, 0])            # (T, dh)
    k = _bf16(k_ref[0, 0])            # (T, dh)
    v = _bf16(v_ref[0, 0])            # (T, dh)
    bias = m_ref[0]                   # (1, T) additive mask bias (incl. pad tokens)
    s = jnp.dot(q, k.T, preferred_element_type=jnp.float32) * scale + bias
    s = s - jnp.max(s, axis=-1, keepdims=True)
    p = jnp.exp(s)
    p = p * pl.reciprocal(jnp.sum(p, axis=-1, keepdims=True), approx=True)
    o_ref[0, 0] = jnp.dot(_bf16(p), v, preferred_element_type=jnp.float32)


def attention(q, k, v, mask_bias):
    """q/k/v: (B, nh, T, dh); mask_bias: (B, 1, T). Returns (B, nh, T, dh)."""
    b, nh, t, dh = q.shape
    kern = functools.partial(_attn_kernel, scale=1.0 / (dh ** 0.5))
    head_spec = pl.BlockSpec((1, 1, t, dh), lambda i, h: (i, h, 0, 0))
    return pl.pallas_call(
        kern,
        out_shape=jax.ShapeDtypeStruct((b, nh, t, dh), jnp.float32),
        grid=(b, nh),
        in_specs=[head_spec, head_spec, head_spec,
                  pl.BlockSpec((1, 1, t), lambda i, h: (i, 0, 0))],
        out_specs=head_spec,
        compiler_params=pltpu.CompilerParams(
            dimension_semantics=("parallel", "parallel"),
            vmem_limit_bytes=_VMEM_LIMIT),
    )(q, k, v, mask_bias)


# ----------------------------- parameters -----------------------------

def init_params(key, feat_dim, hidden, num_layers, num_heads, inter,
                vocab=130, max_pos=64):
    keys = jax.random.split(key, 6 * num_layers + 8)
    ki = iter(keys)

    def nrm(shape):
        return jax.random.normal(next(ki), shape, jnp.float32) * 0.02

    params = dict(
        frame_w=nrm((feat_dim, hidden)), frame_b=jnp.zeros((hidden,), jnp.float32),
        frame_ln_g=jnp.ones((hidden,), jnp.float32),
        frame_ln_b=jnp.zeros((hidden,), jnp.float32),
        word_emb=nrm((vocab, hidden)),
        pos_emb=nrm((max_pos, hidden)),
        type_emb=nrm((2, hidden)),
        emb_ln_g=jnp.ones((hidden,), jnp.float32),
        emb_ln_b=jnp.zeros((hidden,), jnp.float32),
        out_w=nrm((2 * hidden, 1)), out_b=jnp.zeros((1,), jnp.float32),
        num_heads=num_heads,
        layers=[],
    )
    for _ in range(num_layers):
        params['layers'].append(dict(
            w_qkv=nrm((hidden, 3 * hidden)),           # fused Q/K/V projection
            b_qkv=jnp.zeros((3 * hidden,), jnp.float32),
            wo=nrm((hidden, hidden)), bo=jnp.zeros((hidden,), jnp.float32),
            ln1_g=jnp.ones((hidden,), jnp.float32),
            ln1_b=jnp.zeros((hidden,), jnp.float32),
            wi=nrm((hidden, inter)), bi=jnp.zeros((inter,), jnp.float32),
            wf=nrm((inter, hidden)), bf=jnp.zeros((hidden,), jnp.float32),
            ln2_g=jnp.ones((hidden,), jnp.float32),
            ln2_b=jnp.zeros((hidden,), jnp.float32),
        ))
    return params


# ----------------------------- MM forward -----------------------------

def mm_forward(feats_q, feats_r, params):
    B, Lq, F = feats_q.shape
    Lr = feats_r.shape[1]
    L = Lq + Lr
    H = params['frame_w'].shape[1]

    feats = jnp.concatenate([feats_q, feats_r], axis=1)                 # (B, L, F)

    # frame_proj = Linear + LayerNorm(eps=1e-5), fused in one kernel.
    vf = linear_layernorm(feats.reshape(B * L, F), params['frame_w'],
                          params['frame_b'], params['frame_ln_g'],
                          params['frame_ln_b'], eps=1e-5)
    vision_feats = vf.reshape(B, L, H)

    masks = (jnp.sum(jnp.abs(feats), axis=2) > 0).astype(jnp.float32)   # (B, L)

    cls_emb = params['word_emb'][101]
    sep_emb = params['word_emb'][102]
    cls_b = jnp.broadcast_to(cls_emb, (B, 1, H))
    sep_b = jnp.broadcast_to(sep_emb, (B, 1, H))

    inputs_embeds = jnp.concatenate(
        [cls_b, vision_feats[:, :Lq], sep_b, vision_feats[:, Lq:], sep_b], axis=1)
    ones = jnp.ones((B, 1), jnp.float32)
    attention_mask = jnp.concatenate(
        [ones, masks[:, :Lq], ones, masks[:, Lq:], ones], axis=1)       # (B, T)
    T = L + 3
    token_type_ids = jnp.concatenate(
        [jnp.zeros((B, Lq + 2), jnp.int32), jnp.ones((B, Lr + 1), jnp.int32)],
        axis=1)

    # --- synthetic BERT encoder ---
    pos = params['pos_emb'][:T]                                         # (T, H)
    tok = params['type_emb'][token_type_ids]                            # (B, T, H)
    x = inputs_embeds + pos[None] + tok                                 # (B, T, H)

    # Pad the sequence to a sublane multiple; padded tokens are masked out of
    # attention (bias=-1e9) and excluded from pooling.
    T_pad = _round_up(T, 8)
    x = jnp.pad(x, ((0, 0), (0, T_pad - T), (0, 0)))
    attention_mask = jnp.pad(attention_mask, ((0, 0), (0, T_pad - T)))

    xf = layernorm(x.reshape(B * T_pad, H), params['emb_ln_g'],
                   params['emb_ln_b'], eps=1e-12)                       # (B*T_pad, H)

    mask_bias = ((1.0 - attention_mask) * -1e9).reshape(B, 1, T_pad)
    nh = params['num_heads']
    dh = H // nh

    # TODO(synk): at this toy config (H=64, T_pad=24, B=2) every store is
    # lane-sparse and launch overhead dominates; these kernels pay off at
    # production H>=128 / long sequences.
    for lp in params['layers']:
        # fused QKV projection (single tiled bf16 matmul), then the per-head
        # slab gather is done by BlockSpec/DMA inside attention().
        qkv = linear(xf, lp['w_qkv'], lp['b_qkv'])                      # (B*T_pad, 3H)
        qkv = qkv.reshape(B, T_pad, 3, nh, dh)
        q = qkv[:, :, 0].transpose(0, 2, 1, 3)                          # (B, nh, T, dh)
        k = qkv[:, :, 1].transpose(0, 2, 1, 3)
        v = qkv[:, :, 2].transpose(0, 2, 1, 3)
        ao = attention(q, k, v, mask_bias)                              # (B, nh, T, dh)
        ao = ao.transpose(0, 2, 1, 3).reshape(B * T_pad, H)
        # output projection fused with residual add + LayerNorm.
        x1 = linear_layernorm(ao, lp['wo'], lp['bo'],
                              lp['ln1_g'], lp['ln1_b'],
                              residual=xf, eps=1e-12)
        # fully fused FFN: intermediate never written to HBM.
        xf = ffn(x1, lp['wi'], lp['bi'], lp['wf'], lp['bf'],
                 lp['ln2_g'], lp['ln2_b'], residual=x1, eps=1e-12)

    states = xf.reshape(B, T_pad, H)

    # Tiny tail ops in plain JAX (dout=1 / B=2 pallas_calls are pure overhead).
    m = attention_mask[..., None]                                       # (B, T_pad, 1)
    masked = states * m
    length = jnp.sum(attention_mask, axis=1, keepdims=True)             # (B, 1)
    avg_pool = jnp.sum(masked, axis=1) / (length + 1e-5)                # (B, H)
    cls_pool = masked[:, 0]                                             # (B, H)
    cat_pool = jnp.concatenate([cls_pool, avg_pool], axis=1)            # (B, 2H)
    logits = cat_pool @ params['out_w'] + params['out_b']               # (B, 1)
    scores = jax.nn.sigmoid(logits[:, 0])
    # eval-mode forward (self.training == False path)
    return {'scores': scores}


# ----------------------------- main -----------------------------

if __name__ == "__main__":
    key = jax.random.PRNGKey(0)
    k_q, k_r, k_p = jax.random.split(key, 3)

    B, Lq, Lr, FEAT, HID = 2, 8, 8, 32, 64
    feats_q = jax.random.normal(k_q, (B, Lq, FEAT), jnp.float32)
    feats_r = jax.random.normal(k_r, (B, Lr, FEAT), jnp.float32)
    # zero-pad some reference frames so the nonzero mask path is exercised
    feats_r = feats_r.at[1, -3:, :].set(0.0)

    params = init_params(k_p, feat_dim=FEAT, hidden=HID,
                         num_layers=2, num_heads=4, inter=4 * HID)

    out = mm_forward(feats_q, feats_r, params)
    jax.block_until_ready(out['scores'])
    assert out['scores'].shape == (B,)
    print("KERNEL_OK")
</pallas_src>

<mosaic_0001>
module attributes {stable_mosaic.version = 11 : i64} {
  func.func @kernel(%arg0: i32, %arg1: i32, %arg2: memref<32x128xf32, #tpu.memory_space<vmem>>, %arg3: memref<128x64xf32, #tpu.memory_space<vmem>>, %arg4: memref<1x64xf32, #tpu.memory_space<vmem>>, %arg5: memref<1x64xf32, #tpu.memory_space<vmem>>, %arg6: memref<1x64xf32, #tpu.memory_space<vmem>>, %arg7: memref<32x64xf32, #tpu.memory_space<vmem>>) attributes {dimension_semantics = [#tpu.dimension_semantics<parallel>, #tpu.dimension_semantics<arbitrary>], iteration_bounds = array<i64: 1, 1>, scalar_prefetch = 0 : i64, scratch_operands = 0 : i64, tpu.core_type = #tpu.core_type<tc>, window_params = [{transform_indices = @transform_0, window_bounds = array<i64: 32, 128>}, {transform_indices = @transform_1, window_bounds = array<i64: 128, 64>}, {pipeline_mode = #tpu.pipeline_mode<synchronous>, transform_indices = @transform_2, window_bounds = array<i64: 1, 64>}, {pipeline_mode = #tpu.pipeline_mode<synchronous>, transform_indices = @transform_3, window_bounds = array<i64: 1, 64>}, {pipeline_mode = #tpu.pipeline_mode<synchronous>, transform_indices = @transform_4, window_bounds = array<i64: 1, 64>}, {transform_indices = @transform_5, window_bounds = array<i64: 32, 64>}]} {
    %c0_i32 = arith.constant 0 : i32
    %0 = arith.cmpi eq, %arg1, %c0_i32 : i32
    %1 = arith.extui %0 : i1 to i32
    %c0_i32_0 = arith.constant 0 : i32
    %2 = arith.cmpi ne, %1, %c0_i32_0 : i32
    scf.if %2 {
      %cst_10 = arith.constant 0.000000e+00 : f32
      %14 = vector.broadcast %cst_10 : f32 to vector<32x64xf32>
      %c0_11 = arith.constant 0 : index
      %c0_12 = arith.constant 0 : index
      %15 = vector.load %arg7[%c0_11, %c0_12] : memref<32x64xf32, #tpu.memory_space<vmem>>, vector<32x64xf32>
      tpu.vector_store %arg7[%c0_11, %c0_12], %14 {strides = array<i32>} : memref<32x64xf32, #tpu.memory_space<vmem>>, vector<32x64xf32>,
    } else {
    }
    %c0 = arith.constant 0 : index
    %c0_1 = arith.constant 0 : index
    %3 = vector.load %arg7[%c0, %c0_1] : memref<32x64xf32, #tpu.memory_space<vmem>>, vector<32x64xf32>
    %c0_2 = arith.constant 0 : index
    %c0_3 = arith.constant 0 : index
    %4 = vector.load %arg2[%c0_2, %c0_3] : memref<32x128xf32, #tpu.memory_space<vmem>>, vector<32x128xf32>
    %5 = arith.truncf %4 : vector<32x128xf32> to vector<32x128xbf16>
    %c0_4 = arith.constant 0 : index
    %c0_5 = arith.constant 0 : index
    %6 = vector.load %arg3[%c0_4, %c0_5] : memref<128x64xf32, #tpu.memory_space<vmem>>, vector<128x64xf32>
    %7 = arith.truncf %6 : vector<128x64xf32> to vector<128x64xbf16>
    %cst = arith.constant dense<0.000000e+00> : vector<32x64xf32>
    %8 = tpu.matmul %5, %7, %cst {dimension_numbers = #tpu.dot_dimension_numbers<[1], [0], [0], [1], [0, 0, 1, 1], [], []>} : vector<32x128xbf16>, vector<128x64xbf16>, vector<32x64xf32> -> vector<32x64xf32>
    %9 = arith.addf %3, %8 : vector<32x64xf32>
    %c0_6 = arith.constant 0 : index
    %c0_7 = arith.constant 0 : index
    %10 = vector.load %arg7[%c0_6, %c0_7] : memref<32x64xf32, #tpu.memory_space<vmem>>, vector<32x64xf32>
    tpu.vector_store %arg7[%c0_6, %c0_7], %9 {strides = array<i32>} : memref<32x64xf32, #tpu.memory_space<vmem>>, vector<32x64xf32>,
    %c0_i32_8 = arith.constant 0 : i32
    %11 = arith.cmpi eq, %arg1, %c0_i32_8 : i32
    %12 = arith.extui %11 : i1 to i32
    %c0_i32_9 = arith.constant 0 : i32
    %13 = arith.cmpi ne, %12, %c0_i32_9 : i32
    scf.if %13 {
      %c0_10 = arith.constant 0 : index
      %c0_11 = arith.constant 0 : index
      %14 = vector.load %arg7[%c0_10, %c0_11] : memref<32x64xf32, #tpu.memory_space<vmem>>, vector<32x64xf32>
      %c0_12 = arith.constant 0 : index
      %c0_13 = arith.constant 0 : index
      %15 = vector.load %arg4[%c0_12, %c0_13] : memref<1x64xf32, #tpu.memory_space<vmem>>, vector<1x64xf32>
      %16 = vector.broadcast %15 : vector<1x64xf32> to vector<32x64xf32>
      %17 = arith.addf %14, %16 : vector<32x64xf32>
      %cst_14 = arith.constant dense<0.000000e+00> : vector<32xf32>
      %18 = vector.multi_reduction <add>, %17, %cst_14 [1] : vector<32x64xf32> to vector<32xf32>
      %19 = vector.shape_cast %18 : vector<32xf32> to vector<32x1xf32>
      %cst_15 = arith.constant 6.400000e+01 : f32
      %20 = vector.broadcast %cst_15 : f32 to vector<32x1xf32>
      %21 = arith.divf %19, %20 : vector<32x1xf32>
      %22 = vector.broadcast %21 : vector<32x1xf32> to vector<32x64xf32>
      %23 = arith.subf %17, %22 : vector<32x64xf32>
      %24 = arith.mulf %23, %23 : vector<32x64xf32>
      %cst_16 = arith.constant dense<0.000000e+00> : vector<32xf32>
      %25 = vector.multi_reduction <add>, %24, %cst_16 [1] : vector<32x64xf32> to vector<32xf32>
      %26 = vector.shape_cast %25 : vector<32xf32> to vector<32x1xf32>
      %cst_17 = arith.constant 6.400000e+01 : f32
      %27 = vector.broadcast %cst_17 : f32 to vector<32x1xf32>
      %28 = arith.divf %26, %27 : vector<32x1xf32>
      %cst_18 = arith.constant 9.99999974E-6 : f32
      %29 = vector.broadcast %cst_18 : f32 to vector<32x1xf32>
      %30 = arith.addf %28, %29 : vector<32x1xf32>
      %31 = math.rsqrt %30 : vector<32x1xf32>
      %32 = vector.broadcast %31 : vector<32x1xf32> to vector<32x64xf32>
      %33 = arith.mulf %23, %32 : vector<32x64xf32>
      %c0_19 = arith.constant 0 : index
      %c0_20 = arith.constant 0 : index
      %34 = vector.load %arg5[%c0_19, %c0_20] : memref<1x64xf32, #tpu.memory_space<vmem>>, vector<1x64xf32>
      %35 = vector.broadcast %34 : vector<1x64xf32> to vector<32x64xf32>
      %36 = arith.mulf %33, %35 : vector<32x64xf32>
      %c0_21 = arith.constant 0 : index
      %c0_22 = arith.constant 0 : index
      %37 = vector.load %arg6[%c0_21, %c0_22] : memref<1x64xf32, #tpu.memory_space<vmem>>, vector<1x64xf32>
      %38 = vector.broadcast %37 : vector<1x64xf32> to vector<32x64xf32>
      %39 = arith.addf %36, %38 : vector<32x64xf32>
      %c0_23 = arith.constant 0 : index
      %c0_24 = arith.constant 0 : index
      %40 = vector.load %arg7[%c0_23, %c0_24] : memref<32x64xf32, #tpu.memory_space<vmem>>, vector<32x64xf32>
      tpu.vector_store %arg7[%c0_23, %c0_24], %39 {strides = array<i32>} : memref<32x64xf32, #tpu.memory_space<vmem>>, vector<32x64xf32>,
    } else {
    }
    return
  }
  func.func @transform_0(%arg0: i32, %arg1: i32) -> (i32, i32) {
    %c0_i32 = arith.constant 0 : i32
    return %arg0, %arg1 : i32, i32
  }
  func.func @transform_1(%arg0: i32, %arg1: i32) -> (i32, i32) {
    %c0_i32 = arith.constant 0 : i32
    %c0_i32_0 = arith.constant 0 : i32
    return %arg1, %c0_i32 : i32, i32
  }
  func.func @transform_2(%arg0: i32, %arg1: i32) -> (i32, i32) {
    %c0_i32 = arith.constant 0 : i32
    %c0_i32_0 = arith.constant 0 : i32
    %c0_i32_1 = arith.constant 0 : i32
    return %c0_i32, %c0_i32_0 : i32, i32
  }
  func.func @transform_3(%arg0: i32, %arg1: i32) -> (i32, i32) {
    %c0_i32 = arith.constant 0 : i32
    %c0_i32_0 = arith.constant 0 : i32
    %c0_i32_1 = arith.constant 0 : i32
    return %c0_i32, %c0_i32_0 : i32, i32
  }
  func.func @transform_4(%arg0: i32, %arg1: i32) -> (i32, i32) {
    %c0_i32 = arith.constant 0 : i32
    %c0_i32_0 = arith.constant 0 : i32
    %c0_i32_1 = arith.constant 0 : i32
    return %c0_i32, %c0_i32_0 : i32, i32
  }
  func.func @transform_5(%arg0: i32, %arg1: i32) -> (i32, i32) {
    %c0_i32 = arith.constant 0 : i32
    %c0_i32_0 = arith.constant 0 : i32
    return %arg0, %c0_i32 : i32, i32
  }
}

</mosaic_0001>

<llo_original>
// kernel: tpu_custom_call.1
$region0: #{tpu_custom_call.1}
  #allocation0 [shape = 'u32[]', space=smem, size = 0x4, offset = 0x4, fixed_abs, tag = 'smem constant byte address 0x4 - core index']
  #allocation1 [shape = 'u32[144,128]{1,0:T(1,128)}', space=vmem, size = 0x12000, scoped, tag = 'internal scratch']
  %s0 = inlined_call_operand.vmem [shape: f32[32,128], index: 0, kind: input, shape index: {}]
  %s1 = inlined_call_operand.vmem [shape: f32[128,64], index: 1, kind: input, shape index: {}]
  %s2 = inlined_call_operand.vmem [shape: f32[1,64], index: 2, kind: input, shape index: {}]
  %s3 = inlined_call_operand.vmem [shape: f32[1,64], index: 3, kind: input, shape index: {}]
  %s4 = inlined_call_operand.vmem [shape: f32[1,64], index: 4, kind: input, shape index: {}]
  %s5 = inlined_call_operand.hbm [shape: f32[32,64], index: 5, kind: output, shape index: {}]
  %s6 = sld [smem:[#allocation0]]
  $region38: #{tpu_custom_call.1} parent=0
    _
  %s8 = ssub.s32 1, %s6
  %s9 = scalar_select 0, %s8, %s6
  $region1: #{tpu_custom_call.1} parent=0
    #allocation2 [shape = 'u8[16384]{0}', space=vmem, size = 0x4000, scoped, tag = 'output window, operand 0, single buffered']
    #allocation3 [shape = 's32[1]{0}', space=sflag, size = 0x4, scoped, tag = 'scoped memory for tpu_custom_call.1']
    %10 = vsyncpa [#allocation3], 0
    // Predicated region
    $region2: #{tpu_custom_call.1} parent=1 // pred_check
      _
    $region3: #{tpu_custom_call.1} parent=1 // pred_check_branch
      %12 = sbr.rel (0) target = $region5
    $region4: #{tpu_custom_call.1} parent=1 // pred_region
      _
    $region5: #{tpu_custom_call.1} parent=1 // pred_fallthru
      _
    // Predicated region
    $region6: #{tpu_custom_call.1} parent=1 // pred_check
      _
    $region7: #{tpu_custom_call.1} parent=1 // pred_check_branch
      %14 = sbr.rel (0) target = $region9
    $region8: #{tpu_custom_call.1} parent=1 // pred_region
      _
    $region9: #{tpu_custom_call.1} parent=1 // pred_fallthru
      _
    // Predicated region
    $region10: #{tpu_custom_call.1} parent=1 // pred_check
      _
    $region11: #{tpu_custom_call.1} parent=1 // pred_check_branch
      %16 = sbr.rel (0) target = $region13
    $region12: #{tpu_custom_call.1} parent=1 // pred_region
      _
    $region13: #{tpu_custom_call.1} parent=1 // pred_fallthru
      _
    // Predicated region
    $region14: #{tpu_custom_call.1} parent=1 // pred_check
      _
    $region15: #{tpu_custom_call.1} parent=1 // pred_check_branch
      %18 = sbr.rel (0) target = $region17
    $region16: #{tpu_custom_call.1} parent=1 // pred_region
      _
    $region17: #{tpu_custom_call.1} parent=1 // pred_fallthru
      _
    // Predicated region
    $region18: #{tpu_custom_call.1} parent=1 // pred_check
      _
    $region19: #{tpu_custom_call.1} parent=1 // pred_check_branch
      %20 = sbr.rel (0) target = $region21
    $region20: #{tpu_custom_call.1} parent=1 // pred_region
      _
    $region21: #{tpu_custom_call.1} parent=1 // pred_fallthru
      _
    %p22 = scmp.eq.s32.totalorder 0, 0
    // Predicated region
    $region22: #{tpu_custom_call.1} parent=1 // pred_check
      %p23 = pneg %p22
    $region23: #{tpu_custom_call.1} parent=1 // pred_check_branch
      %25 = sbr.rel (%p23) target = $region25
    $region24: #{tpu_custom_call.1} parent=1 // pred_region
      %vm26 = vcmask 523264
      %27 = vst.msk [vmem:[#allocation2] sm:$0xff] %vm26, 0.0
      %28 = vst.msk [vmem:[#allocation2 + $0x8] sm:$0xff] %vm26, 0.0
      %29 = vst.msk [vmem:[#allocation2 + $0x10] sm:$0xff] %vm26, 0.0
      %30 = vst.msk [vmem:[#allocation2 + $0x18] sm:$0xff] %vm26, 0.0
    $region25: #{tpu_custom_call.1} parent=1 // pred_fallthru
      _
    %v31 = vld [vmem:[#allocation2] sm:$0xff]
    %v32 = vld [vmem:[#allocation2 + $0x8] sm:$0xff]
    %v33 = vld [vmem:[#allocation2 + $0x10] sm:$0xff]
    %v34 = vld [vmem:[#allocation2 + $0x18] sm:$0xff]
    %v35 = vld [vmem:[%s0] sm:$0xff]
    %v36 = vld [vmem:[%s0 + $0x8] sm:$0xff]
    %v37 = vld [vmem:[%s0 + $0x10] sm:$0xff]
    %v38 = vld [vmem:[%s0 + $0x18] sm:$0xff]
    %v39 = vpack.c.bf16 %v36, %v35
    %v40 = vpack.c.bf16 %v38, %v37
    %v41 = vld [vmem:[%s1] sm:$0xff]
    %v42 = vld [vmem:[%s1 + $0x8] sm:$0xff]
    %v43 = vld [vmem:[%s1 + $0x10] sm:$0xff]
    %v44 = vld [vmem:[%s1 + $0x18] sm:$0xff]
    %v45 = vld [vmem:[%s1 + $0x20] sm:$0xff]
    %v46 = vld [vmem:[%s1 + $0x28] sm:$0xff]
    %v47 = vld [vmem:[%s1 + $0x30] sm:$0xff]
    %v48 = vld [vmem:[%s1 + $0x38] sm:$0xff]
    %v49 = vld [vmem:[%s1 + $0x40] sm:$0xff]
    %v50 = vld [vmem:[%s1 + $0x48] sm:$0xff]
    %v51 = vld [vmem:[%s1 + $0x50] sm:$0xff]
    %v52 = vld [vmem:[%s1 + $0x58] sm:$0xff]
    %v53 = vld [vmem:[%s1 + $0x60] sm:$0xff]
    %v54 = vld [vmem:[%s1 + $0x68] sm:$0xff]
    %v55 = vld [vmem:[%s1 + $0x70] sm:$0xff]
    %v56 = vld [vmem:[%s1 + $0x78] sm:$0xff]
    %v57 = vpack.c.bf16 %v42, %v41
    %v58 = vpack.c.bf16 %v44, %v43
    %v59 = vpack.c.bf16 %v46, %v45
    %v60 = vpack.c.bf16 %v48, %v47
    %v61 = vpack.c.bf16 %v50, %v49
    %v62 = vpack.c.bf16 %v52, %v51
    %v63 = vpack.c.bf16 %v54, %v53
    %v64 = vpack.c.bf16 %v56, %v55
    %65 = vmatprep.subr.bf16.mxu0 0
    %66 = vmatpush1.bf16.msra.mxu0 %v57
    %67 = vmatprep.subr.bf16.mxu0 0
    %68 = vmatpush1.bf16.msra.mxu0 %v58
    %69 = vmatprep.subr.bf16.mxu0 0
    %70 = vmatpush1.bf16.msra.mxu0 %v59
    %71 = vmatprep.subr.bf16.mxu0 0
    %72 = vmatpush1.bf16.msra.mxu0 %v60
    %73 = vmatprep.subr.bf16.mxu0 0
    %74 = vmatpush1.bf16.msra.mxu0 %v61
    %75 = vmatprep.subr.bf16.mxu0 0
    %76 = vmatpush1.bf16.msra.mxu0 %v62
    %77 = vmatprep.subr.bf16.mxu0 0
    %78 = vmatpush1.bf16.msra.mxu0 %v63
    %79 = vmatprep.subr.bf16.mxu0 0
    %80 = vmatpush1.bf16.msra.mxu0 %v64
    %81 = vmatprep.subr.bf16.mxu0 0
    %82 = vmatpush1.bf16.msra.mxu0 0
    %83 = vmatprep.subr.bf16.mxu0 0
    %84 = vmatpush1.bf16.msra.mxu0 0
    %85 = vmatprep.subr.bf16.mxu0 0
    %86 = vmatpush1.bf16.msra.mxu0 0
    %87 = vmatprep.subr.bf16.mxu0 0
    %88 = vmatpush1.bf16.msra.mxu0 0
    %89 = vmatprep.subr.bf16.mxu0 0
    %90 = vmatpush1.bf16.msra.mxu0 0
    %91 = vmatprep.subr.bf16.mxu0 0
    %92 = vmatpush1.bf16.msra.mxu0 0
    %93 = vmatprep.subr.bf16.mxu0 0
    %94 = vmatpush1.bf16.msra.mxu0 0
    %95 = vmatprep.subr.bf16.mxu0 0
    %96 = vmatpush1.bf16.msra.mxu0 0
    %97 = vmatprep.mubr.bf16.mxu0 0
    %98 = vmatmul.mubr.bf16.gmra.mrb[0].mxu0 %v39
    %v99 = vpop.f32.mrb[0].mxu0
    %v100 = vadd.f32 0.0, %v99
    %v101 = vpop.f32.mrb[0].mxu0
    %v102 = vpop.f32.mrb[0].mxu0
    %v103 = vadd.f32 0.0, %v102
    %v104 = vpop.f32.mrb[0].mxu0
    %105 = vmatprep.mubr.bf16.mxu0 0
    %106 = vmatmul.mubr.bf16.gmra.mrb[0].mxu0 %v40
    %v107 = vpop.f32.mrb[0].mxu0
    %v108 = vadd.f32 0.0, %v107
    %v109 = vpop.f32.mrb[0].mxu0
    %v110 = vpop.f32.mrb[0].mxu0
    %v111 = vadd.f32 0.0, %v110
    %v112 = vpop.f32.mrb[0].mxu0
    %113 = vdwg.mxu0
    %v114 = vadd.f32 %v31, %v100
    %v115 = vadd.f32 %v32, %v103
    %v116 = vadd.f32 %v33, %v108
    %v117 = vadd.f32 %v34, %v111
    %vm118 = vcmask 523264
    %119 = vst.msk [vmem:[#allocation2] sm:$0xff] %vm118, %v114
    %120 = vst.msk [vmem:[#allocation2 + $0x8] sm:$0xff] %vm118, %v115
    %121 = vst.msk [vmem:[#allocation2 + $0x10] sm:$0xff] %vm118, %v116
    %122 = vst.msk [vmem:[#allocation2 + $0x18] sm:$0xff] %vm118, %v117
    // Predicated region
    $region26: #{tpu_custom_call.1} parent=1 // pred_check
      %p123 = pneg %p22
    $region27: #{tpu_custom_call.1} parent=1 // pred_check_branch
      %125 = sbr.rel (%p123) target = $region29
    $region28: #{tpu_custom_call.1} parent=1 // pred_region
      %v126 = vld [vmem:[#allocation2] sm:$0xff]
      %v127 = vld [vmem:[#allocation2 + $0x8] sm:$0xff]
      %v128 = vld [vmem:[#allocation2 + $0x10] sm:$0xff]
      %v129 = vld [vmem:[#allocation2 + $0x18] sm:$0xff]
      %v130 = vld [vmem:[%s2] sm:$0x1]
      %v132 = vlaneseq
      %v133 = vshrl.u32 %v132, 7
      %v134 = vsub.s32 0, %v133
      %v135 = vrot.slane %v130, %v134
      %v137 = vadd.f32 %v126, %v135
      %v138 = vadd.f32 %v127, %v135
      %v139 = vadd.f32 %v128, %v135
      %v140 = vadd.f32 %v129, %v135
      %v141 = vsel %vm118, %v137, 0.0
      %142 = vadd.xlane.f32.xlu0 %v141
      %v143 = vpop.xlane.xlu0 %142
      %v144 = vsel %vm118, %v138, 0.0
      %145 = vadd.xlane.f32.xlu0 %v144
      %v146 = vpop.xlane.xlu0 %145
      %v147 = vsel %vm118, %v139, 0.0
      %148 = vadd.xlane.f32.xlu0 %v147
      %v149 = vpop.xlane.xlu0 %148
      %v150 = vsel %vm118, %v140, 0.0
      %151 = vadd.xlane.f32.xlu0 %v150
      %v152 = vpop.xlane.xlu0 %151
      %v153 = vrcp.pop 64.0
      %v154 = vmul.f32 %v143, %v153
      %v155 = vmul.f32 %v146, %v153
      %v156 = vmul.f32 %v149, %v153
      %v157 = vmul.f32 %v152, %v153
      %v158 = vsub.f32 %v137, %v154
      %v159 = vsub.f32 %v138, %v155
      %v160 = vsub.f32 %v139, %v156
      %v161 = vsub.f32 %v140, %v157
      %v162 = vmul.f32 %v158, %v158
      %v163 = vmul.f32 %v159, %v159
      %v164 = vmul.f32 %v160, %v160
      %v165 = vmul.f32 %v161, %v161
      %v166 = vsel %vm118, %v162, 0.0
      %167 = vadd.xlane.f32.xlu0 %v166
      %v168 = vpop.xlane.xlu0 %167
      %v169 = vsel %vm118, %v163, 0.0
      %170 = vadd.xlane.f32.xlu0 %v169
      %v171 = vpop.xlane.xlu0 %170
      %v172 = vsel %vm118, %v164, 0.0
      %173 = vadd.xlane.f32.xlu0 %v172
      %v174 = vpop.xlane.xlu0 %173
      %v175 = vsel %vm118, %v165, 0.0
      %176 = vadd.xlane.f32.xlu0 %v175
      %v177 = vpop.xlane.xlu0 %176
      %v178 = vmul.f32 %v168, %v153
      %v179 = vmul.f32 %v171, %v153
      %v180 = vmul.f32 %v174, %v153
      %v181 = vmul.f32 %v177, %v153
      %v182 = vadd.f32 %v178, 1e-05
      %v183 = vadd.f32 %v179, 1e-05
      %v184 = vadd.f32 %v180, 1e-05
      %v185 = vadd.f32 %v181, 1e-05
      %v186 = vrsqrt.pop %v182
      %v187 = vrsqrt.pop %v183
      %v188 = vrsqrt.pop %v184
      %v189 = vrsqrt.pop %v185
      %v190 = vmul.f32 %v158, %v186
      %v191 = vmul.f32 %v159, %v187
      %v192 = vmul.f32 %v160, %v188
      %v193 = vmul.f32 %v161, %v189
      %v194 = vld [vmem:[%s3] sm:$0x1]
      %v196 = vlaneseq
      %v197 = vshrl.u32 %v196, 7
      %v198 = vsub.s32 0, %v197
      %v199 = vrot.slane %v194, %v198
      %v201 = vmul.f32 %v190, %v199
      %v202 = vmul.f32 %v191, %v199
      %v203 = vmul.f32 %v192, %v199
      %v204 = vmul.f32 %v193, %v199
      %v205 = vld [vmem:[%s4] sm:$0x1]
      %v207 = vlaneseq
      %v208 = vshrl.u32 %v207, 7
      %v209 = vsub.s32 0, %v208
      %v210 = vrot.slane %v205, %v209
      %v212 = vadd.f32 %v201, %v210
      %v213 = vadd.f32 %v202, %v210
      %v214 = vadd.f32 %v203, %v210
      %v215 = vadd.f32 %v204, %v210
      %216 = vst.msk [vmem:[#allocation2] sm:$0xff] %vm118, %v212
      %217 = vst.msk [vmem:[#allocation2 + $0x8] sm:$0xff] %vm118, %v213
      %218 = vst.msk [vmem:[#allocation2 + $0x10] sm:$0xff] %vm118, %v214
      %219 = vst.msk [vmem:[#allocation2 + $0x18] sm:$0xff] %vm118, %v215
    $region29: #{tpu_custom_call.1} parent=1 // pred_fallthru
      _
    // Predicated region
    $region30: #{tpu_custom_call.1} parent=1 // pred_check
      _
    $region31: #{tpu_custom_call.1} parent=1 // pred_check_branch
      %221 = sbr.rel (0) target = $region33
    $region32: #{tpu_custom_call.1} parent=1 // pred_region
      %s223 = ssub.s32 512, 512
      %224 = vsyncadd [#allocation3], %s223
      %s225 = sshll.u32 [#allocation2], 4
      %s226 = int_to_ptr.vmem [resolvable:$true] %s225
      %231 = dma.vmem_to_hbm [thread:$0]  %s226, 512, %s5, [#allocation3], 128, 128, 8
    $region33: #{tpu_custom_call.1} parent=1 // pred_fallthru
      _
    // Predicated region
    $region34: #{tpu_custom_call.1} parent=1 // pred_check
      _
    $region35: #{tpu_custom_call.1} parent=1 // pred_check_branch
      %233 = sbr.rel (0) target = $region37
    $region36: #{tpu_custom_call.1} parent=1 // pred_region
      %234 = dma.done [#allocation3], 512
    $region37: #{tpu_custom_call.1} parent=1 // pred_fallthru
      _
    %235 = vsyncpa [#allocation3], 1

</llo_original>
